<compile_context>
chip_gen: v7x
topology: tpu7x:2x2x1
jax: 0.10.0
libtpu: 0.0.40
codegen_flags: <defaults>
</compile_context>

<pallas_src>
import functools

import jax
import jax.numpy as jnp
from jax.experimental import pallas as pl
from jax.experimental.pallas import tpu as pltpu


def _round_up(x, m):
    return ((x + m - 1) // m) * m


# ----------------------------- Fused kernel ----------------------------------
def _fused_patch_embed_kernel(p_ref, w_ref, add_ref, gamma_ref, beta_ref,
                              out_ref, *, eps):
    # p_ref:   (1, tm, Dpp)  bf16   im2col patches (row 0 of each batch = 0)
    # w_ref:   (Dpp, E)      bf16   conv weight, transposed + K-padded
    # add_ref: (1, tm, E)    f32    cls/bias + positional embedding
    # gamma_ref, beta_ref: (1, E) f32
    # out_ref: (1, tm, E)    f32
    y = jnp.dot(p_ref[0], w_ref[...], preferred_element_type=jnp.float32)
    x = y + add_ref[0]                                   # (tm, E), f32
    mean = jnp.mean(x, axis=-1, keepdims=True)
    centered = x - mean
    var = jnp.mean(centered * centered, axis=-1, keepdims=True)
    inv = jax.lax.rsqrt(var + eps)
    out_ref[0] = (centered * inv * gamma_ref[...] + beta_ref[...]).astype(
        out_ref.dtype)


def fused_patch_embed(patches_ext, w_bf16, add_term, gamma, beta,
                      *, eps=1e-5, tm_max=256):
    """patches_ext: (B, T, Dpp) bf16 (row 0/batch is zeros)
       w_bf16:      (Dpp, E)    bf16
       add_term:    (1, T, E)   f32
       gamma, beta: (1, E)      f32
       -> (B, T, E) f32
    """
    B, T, Dpp = patches_ext.shape
    E = w_bf16.shape[1]
    # Token-tile size: full T when small (always layout-legal), else a
    # multiple of 8 (sublane-aligned); uneven last tile is masked by Pallas.
    tm = T if T <= tm_max else (tm_max // 8) * 8
    num_j = pl.cdiv(T, tm)

    return pl.pallas_call(
        functools.partial(_fused_patch_embed_kernel, eps=eps),
        out_shape=jax.ShapeDtypeStruct((B, T, E), jnp.float32),
        grid_spec=pltpu.PrefetchScalarGridSpec(
            num_scalar_prefetch=0,
            grid=(num_j, B),                       # B innermost: weight +
            in_specs=[                              # add_term stay resident
                pl.BlockSpec((1, tm, Dpp), lambda j, b: (b, j, 0)),
                pl.BlockSpec((Dpp, E), lambda j, b: (0, 0)),
                pl.BlockSpec((1, tm, E), lambda j, b: (0, j, 0)),
                pl.BlockSpec((1, E), lambda j, b: (0, 0)),
                pl.BlockSpec((1, E), lambda j, b: (0, 0)),
            ],
            out_specs=pl.BlockSpec((1, tm, E), lambda j, b: (b, j, 0)),
        ),
        compiler_params=pltpu.CompilerParams(
            dimension_semantics=("parallel", "parallel")),
    )(patches_ext, w_bf16, add_term, gamma, beta)


# ----------------------------- Module wrapper ---------------------------------
class PatchEmbeddingPallas:
    def __init__(self, in_channel, patch_size, embed_dim, num_patches, key,
                 k_align=128):
        k_w, k_b, k_cls, k_pos = jax.random.split(key, 4)
        self.in_channel = in_channel
        self.patch_size = patch_size
        self.embed_dim = embed_dim
        self.num_patches = num_patches

        self.patch_dim = in_channel * patch_size * patch_size
        self.patch_dim_padded = _round_up(self.patch_dim, k_align)

        # Conv2d(in_channel, embed_dim, kernel_size=P, stride=P) params
        # (PyTorch default uniform init).  conv_w corresponds to torch weight
        # (E, C, P, P) flattened to (E, C*P*P).
        bound = 1.0 / jnp.sqrt(self.patch_dim)
        self.conv_w = jax.random.uniform(
            k_w, (embed_dim, self.patch_dim), jnp.float32, -bound, bound)
        self.conv_b = jax.random.uniform(
            k_b, (embed_dim,), jnp.float32, -bound, bound)
        # cls_token (1,1,E), positional_embedding (1, N+1, E) ~ N(0,1)
        self.cls_token = jax.random.normal(k_cls, (1, 1, embed_dim), jnp.float32)
        self.positional_embedding = jax.random.normal(
            k_pos, (1, num_patches + 1, embed_dim), jnp.float32)
        # LayerNorm(embed_dim): weight=1, bias=0
        self.ln_gamma = jnp.ones((embed_dim,), jnp.float32)
        self.ln_beta = jnp.zeros((embed_dim,), jnp.float32)

        # --- Kernel-ready, precomputed-once parameters -----------------------
        # Transposed, K-zero-padded, bf16 MXU weight (Dpp, E).
        w_t = self.conv_w.T                                       # (Dp, E)
        w_t = jnp.pad(w_t, ((0, self.patch_dim_padded - self.patch_dim), (0, 0)))
        self.w_bf16 = w_t.astype(jnp.bfloat16)
        # Per-token additive term: row 0 = cls_token + pos[0];
        # rows t>=1 = conv_bias + pos[t].  Shape (1, N+1, E), f32.
        bias_rows = jnp.broadcast_to(self.conv_b[None, None, :],
                                     (1, num_patches, embed_dim))
        self.add_term = (jnp.concatenate([self.cls_token, bias_rows], axis=1)
                         + self.positional_embedding).astype(jnp.float32)

    def __call__(self, x):
        # x: (B, C, H, W) -- NCHW, matching the PyTorch module.
        B, C, H, W = x.shape
        P = self.patch_size
        Hp, Wp = H // P, W // P
        N = Hp * Wp
        assert N == self.num_patches

        # im2col: (B,C,H,W) -> (B, N, C*P*P), (c, ph, pw) ordering to match
        # nn.Conv2d weight[E, C, P, P].reshape(E, -1).
        patches = x.reshape(B, C, Hp, P, Wp, P)
        patches = patches.transpose(0, 2, 4, 1, 3, 5)         # (B,Hp,Wp,C,P,P)
        patches = patches.reshape(B, N, self.patch_dim)
        # Single fused pad: prepend one zero row per batch (the cls slot) and
        # zero-pad K up to the MXU-aligned width; cast MXU operand to bf16.
        patches_ext = jnp.pad(
            patches,
            ((0, 0), (1, 0), (0, self.patch_dim_padded - self.patch_dim)),
        ).astype(jnp.bfloat16)                                 # (B, N+1, Dpp)

        return fused_patch_embed(
            patches_ext,
            self.w_bf16,
            self.add_term,
            self.ln_gamma.reshape(1, self.embed_dim),
            self.ln_beta.reshape(1, self.embed_dim),
            eps=1e-5,
        )


# ----------------------------- Pure-JAX (f32) reference -----------------------
def _reference(mod, x):
    B, C, H, W = x.shape
    P = mod.patch_size
    Hp, Wp = H // P, W // P
    patches = x.reshape(B, C, Hp, P, Wp, P).transpose(0, 2, 4, 1, 3, 5)
    patches = patches.reshape(B, Hp * Wp, C * P * P)
    pe = patches @ mod.conv_w.T + mod.conv_b
    cls = jnp.broadcast_to(mod.cls_token, (B, 1, mod.embed_dim))
    t = jnp.concatenate([cls, pe], axis=1) + mod.positional_embedding
    mean = jnp.mean(t, axis=-1, keepdims=True)
    var = jnp.mean((t - mean) ** 2, axis=-1, keepdims=True)
    return (t - mean) / jnp.sqrt(var + 1e-5) * mod.ln_gamma + mod.ln_beta


if __name__ == "__main__":
    key = jax.random.PRNGKey(0)
    k_param, k_x = jax.random.split(key)

    # Small shapes: batch=2, in_channel=4, image 16x16, patch 4 -> 16 patches,
    # embed_dim=32.
    B, C, H, W = 2, 4, 16, 16
    P, E = 4, 32
    N = (H // P) * (W // P)

    mod = PatchEmbeddingPallas(in_channel=C, patch_size=P, embed_dim=E,
                               num_patches=N, key=k_param)
    x = jax.random.normal(k_x, (B, C, H, W), jnp.float32)

    fwd = jax.jit(lambda inp: mod(inp))
    out = fwd(x)
    out = jax.block_until_ready(out)
    assert out.shape == (B, N + 1, E), out.shape

    ref = _reference(mod, x)
    # bf16 MXU operands vs f32 reference -> tolerance loosened accordingly.
    assert jnp.allclose(out, ref, atol=1e-2, rtol=1e-2), (
        float(jnp.max(jnp.abs(out - ref))))

    print("KERNEL_OK")
</pallas_src>

<mosaic_0001>
module attributes {stable_mosaic.version = 11 : i64} {
  func.func @_fused_patch_embed_kernel(%arg0: i32, %arg1: i32, %arg2: memref<1x17x128xbf16, #tpu.memory_space<vmem>>, %arg3: memref<128x32xbf16, #tpu.memory_space<vmem>>, %arg4: memref<1x17x32xf32, #tpu.memory_space<vmem>>, %arg5: memref<1x32xf32, #tpu.memory_space<vmem>>, %arg6: memref<1x32xf32, #tpu.memory_space<vmem>>, %arg7: memref<1x17x32xf32, #tpu.memory_space<vmem>>) attributes {dimension_semantics = [#tpu.dimension_semantics<parallel>, #tpu.dimension_semantics<parallel>], iteration_bounds = array<i64: 1, 2>, scalar_prefetch = 0 : i64, scratch_operands = 0 : i64, tpu.core_type = #tpu.core_type<tc>, window_params = [{transform_indices = @transform_0, window_bounds = array<i64: 1, 17, 128>}, {pipeline_mode = #tpu.pipeline_mode<synchronous>, transform_indices = @transform_1, window_bounds = array<i64: 128, 32>}, {transform_indices = @transform_2, window_bounds = array<i64: 1, 17, 32>}, {pipeline_mode = #tpu.pipeline_mode<synchronous>, transform_indices = @transform_3, window_bounds = array<i64: 1, 32>}, {pipeline_mode = #tpu.pipeline_mode<synchronous>, transform_indices = @transform_4, window_bounds = array<i64: 1, 32>}, {transform_indices = @transform_5, window_bounds = array<i64: 1, 17, 32>}]} {
    %c0 = arith.constant 0 : index
    %c0_0 = arith.constant 0 : index
    %c0_1 = arith.constant 0 : index
    %0 = vector.load %arg2[%c0, %c0_0, %c0_1] : memref<1x17x128xbf16, #tpu.memory_space<vmem>>, vector<1x17x128xbf16>
    %1 = vector.shape_cast %0 : vector<1x17x128xbf16> to vector<17x128xbf16>
    %c0_2 = arith.constant 0 : index
    %c0_3 = arith.constant 0 : index
    %2 = vector.load %arg3[%c0_2, %c0_3] : memref<128x32xbf16, #tpu.memory_space<vmem>>, vector<128x32xbf16>
    %cst = arith.constant dense<0.000000e+00> : vector<17x32xf32>
    %3 = tpu.matmul %1, %2, %cst {dimension_numbers = #tpu.dot_dimension_numbers<[1], [0], [0], [1], [0, 0, 1, 1], [], []>} : vector<17x128xbf16>, vector<128x32xbf16>, vector<17x32xf32> -> vector<17x32xf32>
    %c0_4 = arith.constant 0 : index
    %c0_5 = arith.constant 0 : index
    %c0_6 = arith.constant 0 : index
    %4 = vector.load %arg4[%c0_4, %c0_5, %c0_6] : memref<1x17x32xf32, #tpu.memory_space<vmem>>, vector<1x17x32xf32>
    %5 = vector.shape_cast %4 : vector<1x17x32xf32> to vector<17x32xf32>
    %6 = arith.addf %3, %5 : vector<17x32xf32>
    %cst_7 = arith.constant dense<0.000000e+00> : vector<17xf32>
    %7 = vector.multi_reduction <add>, %6, %cst_7 [1] : vector<17x32xf32> to vector<17xf32>
    %8 = vector.shape_cast %7 : vector<17xf32> to vector<17x1xf32>
    %cst_8 = arith.constant 3.200000e+01 : f32
    %9 = vector.broadcast %cst_8 : f32 to vector<17x1xf32>
    %10 = arith.divf %8, %9 : vector<17x1xf32>
    %11 = vector.broadcast %10 : vector<17x1xf32> to vector<17x32xf32>
    %12 = arith.subf %6, %11 : vector<17x32xf32>
    %13 = arith.mulf %12, %12 : vector<17x32xf32>
    %cst_9 = arith.constant dense<0.000000e+00> : vector<17xf32>
    %14 = vector.multi_reduction <add>, %13, %cst_9 [1] : vector<17x32xf32> to vector<17xf32>
    %15 = vector.shape_cast %14 : vector<17xf32> to vector<17x1xf32>
    %cst_10 = arith.constant 3.200000e+01 : f32
    %16 = vector.broadcast %cst_10 : f32 to vector<17x1xf32>
    %17 = arith.divf %15, %16 : vector<17x1xf32>
    %cst_11 = arith.constant 9.99999974E-6 : f32
    %18 = vector.broadcast %cst_11 : f32 to vector<17x1xf32>
    %19 = arith.addf %17, %18 : vector<17x1xf32>
    %20 = math.rsqrt %19 : vector<17x1xf32>
    %21 = vector.broadcast %20 : vector<17x1xf32> to vector<17x32xf32>
    %22 = arith.mulf %12, %21 : vector<17x32xf32>
    %c0_12 = arith.constant 0 : index
    %c0_13 = arith.constant 0 : index
    %23 = vector.load %arg5[%c0_12, %c0_13] : memref<1x32xf32, #tpu.memory_space<vmem>>, vector<1x32xf32>
    %24 = vector.broadcast %23 : vector<1x32xf32> to vector<17x32xf32>
    %25 = arith.mulf %22, %24 : vector<17x32xf32>
    %c0_14 = arith.constant 0 : index
    %c0_15 = arith.constant 0 : index
    %26 = vector.load %arg6[%c0_14, %c0_15] : memref<1x32xf32, #tpu.memory_space<vmem>>, vector<1x32xf32>
    %27 = vector.broadcast %26 : vector<1x32xf32> to vector<17x32xf32>
    %28 = arith.addf %25, %27 : vector<17x32xf32>
    %c0_16 = arith.constant 0 : index
    %c0_17 = arith.constant 0 : index
    %c0_18 = arith.constant 0 : index
    %29 = vector.load %arg7[%c0_16, %c0_17, %c0_18] : memref<1x17x32xf32, #tpu.memory_space<vmem>>, vector<1x17x32xf32>
    %30 = vector.shape_cast %29 : vector<1x17x32xf32> to vector<17x32xf32>
    %31 = vector.shape_cast %28 : vector<17x32xf32> to vector<1x17x32xf32>
    tpu.vector_store %arg7[%c0_16, %c0_17, %c0_18], %31 {strides = array<i32>} : memref<1x17x32xf32, #tpu.memory_space<vmem>>, vector<1x17x32xf32>,
    return
  }
  func.func @transform_0(%arg0: i32, %arg1: i32) -> (i32, i32, i32) {
    %c0_i32 = arith.constant 0 : i32
    %c0_i32_0 = arith.constant 0 : i32
    return %arg1, %arg0, %c0_i32 : i32, i32, i32
  }
  func.func @transform_1(%arg0: i32, %arg1: i32) -> (i32, i32) {
    %c0_i32 = arith.constant 0 : i32
    %c0_i32_0 = arith.constant 0 : i32
    %c0_i32_1 = arith.constant 0 : i32
    return %c0_i32, %c0_i32_0 : i32, i32
  }
  func.func @transform_2(%arg0: i32, %arg1: i32) -> (i32, i32, i32) {
    %c0_i32 = arith.constant 0 : i32
    %c0_i32_0 = arith.constant 0 : i32
    %c0_i32_1 = arith.constant 0 : i32
    return %c0_i32, %arg0, %c0_i32_0 : i32, i32, i32
  }
  func.func @transform_3(%arg0: i32, %arg1: i32) -> (i32, i32) {
    %c0_i32 = arith.constant 0 : i32
    %c0_i32_0 = arith.constant 0 : i32
    %c0_i32_1 = arith.constant 0 : i32
    return %c0_i32, %c0_i32_0 : i32, i32
  }
  func.func @transform_4(%arg0: i32, %arg1: i32) -> (i32, i32) {
    %c0_i32 = arith.constant 0 : i32
    %c0_i32_0 = arith.constant 0 : i32
    %c0_i32_1 = arith.constant 0 : i32
    return %c0_i32, %c0_i32_0 : i32, i32
  }
  func.func @transform_5(%arg0: i32, %arg1: i32) -> (i32, i32, i32) {
    %c0_i32 = arith.constant 0 : i32
    %c0_i32_0 = arith.constant 0 : i32
    return %arg1, %arg0, %c0_i32 : i32, i32, i32
  }
}

</mosaic_0001>

<llo_original>
// kernel: _lambda_.1
$region0: #{_lambda_.1}
  #allocation0 [shape = 'u32[]', space=smem, size = 0x4, offset = 0x4, fixed_abs, tag = 'smem constant byte address 0x4 - core index']
  #allocation1 [shape = 'u32[144,128]{1,0:T(1,128)}', space=vmem, size = 0x12000, scoped, tag = 'internal scratch']
  %s0 = inlined_call_operand.vmem [shape: bf16[2,17,128], index: 0, kind: input, shape index: {}]
  %s1 = inlined_call_operand.vmem [shape: bf16[128,32], index: 1, kind: input, shape index: {}]
  %s2 = inlined_call_operand.vmem [shape: f32[1,17,32], index: 2, kind: input, shape index: {}]
  %s3 = inlined_call_operand.vmem [shape: f32[1,32], index: 3, kind: input, shape index: {}]
  %s4 = inlined_call_operand.vmem [shape: f32[1,32], index: 4, kind: input, shape index: {}]
  %s5 = inlined_call_operand.vmem [shape: f32[2,17,32], index: 5, kind: output, shape index: {}]
  %s6 = sld [smem:[#allocation0]]
  $region53: #{_lambda_.1} parent=0
    _
  %s8 = ssub.s32 1, %s6
  %s9 = scalar_select 0, %s8, %s6
  loop: start=0, step=1, limit=4
  $region2: #{_lambda_.1} parent=0 // loop_pre_header
    _
  $region3: #{_lambda_.1} parent=0 // loop_header
    %s11 = sphi 0, %s15
    %p12 = scmp.ge.s32.totalorder %s11, 4
    %s18 = sphi 0, %s30
    %s19 = sphi 0, %s26
    %s20 = sphi 0, %s18
    %s21 = sphi 0, %s19
    %s22 = sphi 0, %s20
    %s23 = sphi 0, %s21
    %s35 = sphi 0, %s37
    %s38 = sphi 0, %s35
    %s39 = sphi 0, %s38
    %s55 = sphi 0, %s39
    %s59 = sphi 0, %s59
    %s61 = sphi 0, %s59
    %s62 = sphi 0, %s61
    %s76 = sphi 0, %s62
    %s82 = sphi 0, %s84
    %s85 = sphi 0, %s82
    %s86 = sphi 0, %s85
    %s102 = sphi 0, %s86
    %s106 = sphi 0, %s106
    %s108 = sphi 0, %s106
    %s109 = sphi 0, %s108
    %s123 = sphi 0, %s109
    %s127 = sphi 0, %s127
    %s129 = sphi 0, %s127
    %s130 = sphi 0, %s129
    %s144 = sphi 0, %s130
    %s152 = sphi 0, %s154
    %s155 = sphi 0, %s152
    %s156 = sphi 0, %s155
    %s172 = sphi 0, %s156
  $region4: #{_lambda_.1} parent=0 // loop_header_branch
    %14 = sbr.rel (%p12) target = $region8
  $region5: #{_lambda_.1} parent=0 // loop_body
    %s16 = ssub.s32 %s11, 1
    %s17 = ssub.s32 %s11, 2
    %s24 = sadd.s32 1, %s19
    %p25 = scmp.ge.s32.totalorder %s24, 2
    %s26 = scalar_select %p25, 0, %s24
    %s27 = sadd.s32 1, %s18
    %s28 = scalar_select %p25, %s27, %s18
    %p29 = scmp.ge.s32.totalorder %s28, 1
    %s30 = scalar_select %p29, 0, %s28
    %s31 = ssub.s32 %s19, %s26
    %s32 = ssub.s32 %s18, %s30
    %s33 = sor.u32 %s31, %s32
    %p34 = scmp.eq.s32.totalorder %s33, 0
    %s36 = sadd.s32 %s35, 1
    %s37 = scalar_select %p34, %s35, %s36
    %p40 = pneg %p34
    %p41 = scmp.eq.s32.totalorder %s11, 1
    %p42 = por %p40, %p41
    %p43 = scmp.ne.s32.totalorder %s35, %s38
    %p44 = scmp.eq.s32.totalorder %s11, 0
    %p45 = por %p43, %p44
    %p46 = scmp.ne.s32.totalorder %s35, %s38
    %p47 = scmp.eq.s32.totalorder %s16, 1
    %p48 = por %p46, %p47
    %p49 = scmp.ne.s32.totalorder %s38, %s39
    %p50 = scmp.eq.s32.totalorder %s16, 0
    %p51 = por %p49, %p50
    %p52 = scmp.ne.s32.totalorder %s38, %s39
    %p53 = scmp.eq.s32.totalorder %s17, 1
    %p54 = por %p52, %p53
    %p56 = scmp.ne.s32.totalorder %s39, %s55
    %p57 = scmp.eq.s32.totalorder %s17, 0
    %p58 = por %p56, %p57
    %s60 = sadd.s32 %s59, 1
    %p63 = scmp.eq.s32.totalorder %s11, 1
    %p64 = scmp.ne.s32.totalorder %s59, %s61
    %p65 = scmp.eq.s32.totalorder %s11, 0
    %p66 = por %p64, %p65
    %p67 = scmp.ne.s32.totalorder %s59, %s61
    %p68 = scmp.eq.s32.totalorder %s16, 1
    %p69 = por %p67, %p68
    %p70 = scmp.ne.s32.totalorder %s61, %s62
    %p71 = scmp.eq.s32.totalorder %s16, 0
    %p72 = por %p70, %p71
    %p73 = scmp.ne.s32.totalorder %s61, %s62
    %p74 = scmp.eq.s32.totalorder %s17, 1
    %p75 = por %p73, %p74
    %p77 = scmp.ne.s32.totalorder %s62, %s76
    %p78 = scmp.eq.s32.totalorder %s17, 0
    %p79 = por %p77, %p78
    %s80 = ssub.s32 %s18, %s30
    %p81 = scmp.eq.s32.totalorder %s80, 0
    %s83 = sadd.s32 %s82, 1
    %s84 = scalar_select %p81, %s82, %s83
    %p87 = pneg %p81
    %p88 = scmp.eq.s32.totalorder %s11, 1
    %p89 = por %p87, %p88
    %p90 = scmp.ne.s32.totalorder %s82, %s85
    %p91 = scmp.eq.s32.totalorder %s11, 0
    %p92 = por %p90, %p91
    %p93 = scmp.ne.s32.totalorder %s82, %s85
    %p94 = scmp.eq.s32.totalorder %s16, 1
    %p95 = por %p93, %p94
    %p96 = scmp.ne.s32.totalorder %s85, %s86
    %p97 = scmp.eq.s32.totalorder %s16, 0
    %p98 = por %p96, %p97
    %p99 = scmp.ne.s32.totalorder %s85, %s86
    %p100 = scmp.eq.s32.totalorder %s17, 1
    %p101 = por %p99, %p100
    %p103 = scmp.ne.s32.totalorder %s86, %s102
    %p104 = scmp.eq.s32.totalorder %s17, 0
    %p105 = por %p103, %p104
    %s107 = sadd.s32 %s106, 1
    %p110 = scmp.eq.s32.totalorder %s11, 1
    %p111 = scmp.ne.s32.totalorder %s106, %s108
    %p112 = scmp.eq.s32.totalorder %s11, 0
    %p113 = por %p111, %p112
    %p114 = scmp.ne.s32.totalorder %s106, %s108
    %p115 = scmp.eq.s32.totalorder %s16, 1
    %p116 = por %p114, %p115
    %p117 = scmp.ne.s32.totalorder %s108, %s109
    %p118 = scmp.eq.s32.totalorder %s16, 0
    %p119 = por %p117, %p118
    %p120 = scmp.ne.s32.totalorder %s108, %s109
    %p121 = scmp.eq.s32.totalorder %s17, 1
    %p122 = por %p120, %p121
    %p124 = scmp.ne.s32.totalorder %s109, %s123
    %p125 = scmp.eq.s32.totalorder %s17, 0
    %p126 = por %p124, %p125
    %s128 = sadd.s32 %s127, 1
    %p131 = scmp.eq.s32.totalorder %s11, 1
    %p132 = scmp.ne.s32.totalorder %s127, %s129
    %p133 = scmp.eq.s32.totalorder %s11, 0
    %p134 = por %p132, %p133
    %p135 = scmp.ne.s32.totalorder %s127, %s129
    %p136 = scmp.eq.s32.totalorder %s16, 1
    %p137 = por %p135, %p136
    %p138 = scmp.ne.s32.totalorder %s129, %s130
    %p139 = scmp.eq.s32.totalorder %s16, 0
    %p140 = por %p138, %p139
    %p141 = scmp.ne.s32.totalorder %s129, %s130
    %p142 = scmp.eq.s32.totalorder %s17, 1
    %p143 = por %p141, %p142
    %p145 = scmp.ne.s32.totalorder %s130, %s144
    %p146 = scmp.eq.s32.totalorder %s17, 0
    %p147 = por %p145, %p146
    %s148 = ssub.s32 %s19, %s26
    %s149 = ssub.s32 %s18, %s30
    %s150 = sor.u32 %s148, %s149
    %p151 = scmp.eq.s32.totalorder %s150, 0
    %s153 = sadd.s32 %s152, 1
    %s154 = scalar_select %p151, %s152, %s153
    %p157 = pneg %p151
    %p158 = scmp.eq.s32.totalorder %s11, 1
    %p159 = por %p157, %p158
    %p160 = scmp.ne.s32.totalorder %s152, %s155
    %p161 = scmp.eq.s32.totalorder %s11, 0
    %p162 = por %p160, %p161
    %p163 = scmp.ne.s32.totalorder %s152, %s155
    %p164 = scmp.eq.s32.totalorder %s16, 1
    %p165 = por %p163, %p164
    %p166 = scmp.ne.s32.totalorder %s155, %s156
    %p167 = scmp.eq.s32.totalorder %s16, 0
    %p168 = por %p166, %p167
    %p169 = scmp.ne.s32.totalorder %s155, %s156
    %p170 = scmp.eq.s32.totalorder %s17, 1
    %p171 = por %p169, %p170
    %p173 = scmp.ne.s32.totalorder %s156, %s172
    %p174 = scmp.eq.s32.totalorder %s17, 0
    %p175 = por %p173, %p174
    %p176 = scmp.le.s32.totalorder 1, %s11
    %p177 = scmp.lt.s32.totalorder %s11, 3
    %p178 = pnand %p176, %p177
    %p179 = pneg %p178
    // Predicated region
    $region9: #{_lambda_.1} parent=5 // pred_check
      _
    $region10: #{_lambda_.1} parent=5 // pred_check_branch
      %181 = sbr.rel (%p178) target = $region12
    $region11: #{_lambda_.1} parent=5 // pred_region
      %s182 = ssub.s32 %s11, 1
      // Predicated region
      $region13: #{_lambda_.1} parent=11 // pred_check
        %p183 = pneg %p72
      $region14: #{_lambda_.1} parent=11 // pred_check_branch
        %185 = sbr.rel (%p183) target = $region16
      $region15: #{_lambda_.1} parent=11 // pred_region
        _
      $region16: #{_lambda_.1} parent=11 // pred_fallthru
        _
      // Predicated region
      $region17: #{_lambda_.1} parent=11 // pred_check
        %p186 = pneg %p98
      $region18: #{_lambda_.1} parent=11 // pred_check_branch
        %188 = sbr.rel (%p186) target = $region20
      $region19: #{_lambda_.1} parent=11 // pred_region
        %s189 = smul.u32 3, %s20
        %p190 = scmp.lt.s32.totalorder %s189, 2
        %s191 = scalar_select %p190, %s189, 2
        %s192 = smul.addr %s191, 8
        %s193 = scalar_lea.vmem %s2, %s192
        %s194 = smul.u32 3, %s20
      $region20: #{_lambda_.1} parent=11 // pred_fallthru
        _
      // Predicated region
      $region21: #{_lambda_.1} parent=11 // pred_check
        %p195 = pneg %p119
      $region22: #{_lambda_.1} parent=11 // pred_check_branch
        %197 = sbr.rel (%p195) target = $region24
      $region23: #{_lambda_.1} parent=11 // pred_region
        _
      $region24: #{_lambda_.1} parent=11 // pred_fallthru
        _
      // Predicated region
      $region25: #{_lambda_.1} parent=11 // pred_check
        %p198 = pneg %p140
      $region26: #{_lambda_.1} parent=11 // pred_check_branch
        %200 = sbr.rel (%p198) target = $region28
      $region27: #{_lambda_.1} parent=11 // pred_region
        _
      $region28: #{_lambda_.1} parent=11 // pred_fallthru
        _
    $region12: #{_lambda_.1} parent=5 // pred_fallthru
      _
    %p201 = scmp.lt.s32.totalorder %s11, 2
    // Predicated region
    $region29: #{_lambda_.1} parent=5 // pred_check
      %p202 = pneg %p201
    $region30: #{_lambda_.1} parent=5 // pred_check_branch
      %204 = sbr.rel (%p202) target = $region32
    $region31: #{_lambda_.1} parent=5 // pred_region
      // Predicated region
      $region33: #{_lambda_.1} parent=31 // pred_check
        %p205 = pneg %p45
      $region34: #{_lambda_.1} parent=31 // pred_check_branch
        %207 = sbr.rel (%p205) target = $region36
      $region35: #{_lambda_.1} parent=31 // pred_region
        %s208 = smul.u32 3, %s18
        %p209 = scmp.lt.s32.totalorder %s19, 1
        %s210 = scalar_select %p209, %s19, 1
        %p211 = scmp.lt.s32.totalorder %s208, 2
        %s212 = scalar_select %p211, %s208, 2
        %s213 = smul.addr %s210, 3
        %s214 = sadd.s32 %s212, %s213
        %s215 = smul.addr %s214, 4
        %s216 = scalar_lea.vmem %s0, %s215
        %s217 = smul.u32 3, %s18
      $region36: #{_lambda_.1} parent=31 // pred_fallthru
        _
    $region32: #{_lambda_.1} parent=5 // pred_fallthru
      _
    %p218 = scmp.le.s32.totalorder 1, %s11
    %p219 = scmp.lt.s32.totalorder %s11, 3
    %p220 = pnand %p218, %p219
    %p221 = pneg %p220
    // Predicated region
    $region37: #{_lambda_.1} parent=5 // pred_check
      _
    $region38: #{_lambda_.1} parent=5 // pred_check_branch
      %223 = sbr.rel (%p220) target = $region40
    $region39: #{_lambda_.1} parent=5 // pred_region
      %s224 = ssub.s32 %s11, 1
      %s225 = smul.u32 3, %s20
      %p226 = scmp.lt.s32.totalorder %s21, 1
      %s227 = scalar_select %p226, %s21, 1
      %p228 = scmp.lt.s32.totalorder %s225, 2
      %s229 = scalar_select %p228, %s225, 2
      %s230 = smul.addr %s227, 3
      %s231 = sadd.s32 %s229, %s230
      %s232 = smul.addr %s231, 4
      %s233 = scalar_lea.vmem %s0, %s232
      %p234 = pneg %p51
      %p235 = pneg %p48
      %p236 = pneg %p72
      %p237 = pneg %p69
      %s238 = smul.u32 3, %s20
      %p239 = scmp.lt.s32.totalorder %s238, 2
      %s240 = scalar_select %p239, %s238, 2
      %s241 = smul.addr %s240, 8
      %s242 = scalar_lea.vmem %s2, %s241
      %p243 = pneg %p98
      %p244 = pneg %p95
      %p245 = pneg %p119
      %p246 = pneg %p116
      %p247 = pneg %p140
      %p248 = pneg %p137
      %p249 = pneg %p168
      %p250 = pneg %p165
      %s251 = smul.u32 3, %s20
      %p252 = scmp.lt.s32.totalorder %s21, 1
      %s253 = scalar_select %p252, %s21, 1
      %p254 = scmp.lt.s32.totalorder %s251, 2
      %s255 = scalar_select %p254, %s251, 2
      %s256 = smul.addr %s253, 3
      %s257 = sadd.s32 %s255, %s256
      %s258 = smul.addr %s257, 8
      %s259 = scalar_lea.vmem %s5, %s258
      %s260 = smul.u32 3, %s20
      %p261 = scmp.lt.s32.totalorder %s21, 1
      %s262 = scalar_select %p261, %s21, 1
      %p263 = scmp.lt.s32.totalorder %s260, 2
      %s264 = scalar_select %p263, %s260, 2
      %s265 = smul.addr %s262, 3
      %s266 = sadd.s32 %s264, %s265
      %s267 = smul.addr %s266, 4
      %s268 = scalar_lea.vmem %s0, %s267
      %s269 = smul.u32 3, %s20
      %s270 = smul.u32 3, %s20
      %p271 = scmp.lt.s32.totalorder %s270, 2
      %s272 = scalar_select %p271, %s270, 2
      %s273 = smul.addr %s272, 8
      %s274 = scalar_lea.vmem %s2, %s273
      %s275 = smul.u32 3, %s20
      %s276 = smul.u32 3, %s20
      %p277 = scmp.lt.s32.totalorder %s21, 1
      %s278 = scalar_select %p277, %s21, 1
      %p279 = scmp.lt.s32.totalorder %s276, 2
      %s280 = scalar_select %p279, %s276, 2
      %s281 = smul.addr %s278, 3
      %s282 = sadd.s32 %s280, %s281
      %s283 = smul.addr %s282, 8
      %s284 = scalar_lea.vmem %s5, %s283
      %s285 = smul.u32 3, %s20
      %v287 = vld [vmem:[%s268] sm:$0xf]
      %v288 = vld [vmem:[%s268 + $0x4] sm:$0xf]
      %v289 = vld [vmem:[%s268 + $0x8] sm:$0x1]
      %v290 = vld [vmem:[%s1] sm:$0xf]
      %v291 = vld [vmem:[%s1 + $0x4] sm:$0xf]
      %v292 = vld [vmem:[%s1 + $0x8] sm:$0xf]
      %v293 = vld [vmem:[%s1 + $0xc] sm:$0xf]
      %v294 = vld [vmem:[%s1 + $0x10] sm:$0xf]
      %v295 = vld [vmem:[%s1 + $0x14] sm:$0xf]
      %v296 = vld [vmem:[%s1 + $0x18] sm:$0xf]
      %v297 = vld [vmem:[%s1 + $0x1c] sm:$0xf]
      %v298 = vld [vmem:[%s1 + $0x20] sm:$0xf]
      %v299 = vld [vmem:[%s1 + $0x24] sm:$0xf]
      %v300 = vld [vmem:[%s1 + $0x28] sm:$0xf]
      %v301 = vld [vmem:[%s1 + $0x2c] sm:$0xf]
      %v302 = vld [vmem:[%s1 + $0x30] sm:$0xf]
      %v303 = vld [vmem:[%s1 + $0x34] sm:$0xf]
      %v304 = vld [vmem:[%s1 + $0x38] sm:$0xf]
      %v305 = vld [vmem:[%s1 + $0x3c] sm:$0xf]
      %v306 = vld [vmem:[%s274] sm:$0xff]
      %v307 = vld [vmem:[%s274 + $0x8] sm:$0xff]
      %v308 = vld [vmem:[%s274 + $0x10] sm:$0x1]
      %v312 = vunpack.c.l.b16 %v287
      %v313 = vunpack.c.l.b16 %v288
      %v314 = vunpack.c.l.b16 %v289
      %v315 = vpack.c.b16 %v313, %v312
      %v316 = vpack.c.b16 %v314, %v314
      %v335 = vunpack.c.l.b16 %v290
      %v336 = vunpack.c.l.b16 %v291
      %v337 = vunpack.c.l.b16 %v292
      %v338 = vunpack.c.l.b16 %v293
      %v339 = vunpack.c.l.b16 %v294
      %v340 = vunpack.c.l.b16 %v295
      %v341 = vunpack.c.l.b16 %v296
      %v342 = vunpack.c.l.b16 %v297
      %v343 = vunpack.c.l.b16 %v298
      %v344 = vunpack.c.l.b16 %v299
      %v345 = vunpack.c.l.b16 %v300
      %v346 = vunpack.c.l.b16 %v301
      %v347 = vunpack.c.l.b16 %v302
      %v348 = vunpack.c.l.b16 %v303
      %v349 = vunpack.c.l.b16 %v304
      %v350 = vunpack.c.l.b16 %v305
      %v351 = vpack.c.b16 %v336, %v335
      %v352 = vpack.c.b16 %v338, %v337
      %v353 = vpack.c.b16 %v340, %v339
      %v354 = vpack.c.b16 %v342, %v341
      %v355 = vpack.c.b16 %v344, %v343
      %v356 = vpack.c.b16 %v346, %v345
      %v357 = vpack.c.b16 %v348, %v347
      %v358 = vpack.c.b16 %v350, %v349
      %367 = vmatprep.subr.bf16.mxu0 0
      %368 = vmatpush1.bf16.msra.mxu0 %v351
      %369 = vmatprep.subr.bf16.mxu0 0
      %370 = vmatpush1.bf16.msra.mxu0 %v352
      %371 = vmatprep.subr.bf16.mxu0 0
      %372 = vmatpush1.bf16.msra.mxu0 %v353
      %373 = vmatprep.subr.bf16.mxu0 0
      %374 = vmatpush1.bf16.msra.mxu0 %v354
      %375 = vmatprep.subr.bf16.mxu0 0
      %376 = vmatpush1.bf16.msra.mxu0 %v355
      %377 = vmatprep.subr.bf16.mxu0 0
      %378 = vmatpush1.bf16.msra.mxu0 %v356
      %379 = vmatprep.subr.bf16.mxu0 0
      %380 = vmatpush1.bf16.msra.mxu0 %v357
      %381 = vmatprep.subr.bf16.mxu0 0
      %382 = vmatpush1.bf16.msra.mxu0 %v358
      %383 = vmatprep.subr.bf16.mxu0 0
      %384 = vmatpush1.bf16.msra.mxu0 0
      %385 = vmatprep.subr.bf16.mxu0 0
      %386 = vmatpush1.bf16.msra.mxu0 0
      %387 = vmatprep.subr.bf16.mxu0 0
      %388 = vmatpush1.bf16.msra.mxu0 0
      %389 = vmatprep.subr.bf16.mxu0 0
      %390 = vmatpush1.bf16.msra.mxu0 0
      %391 = vmatprep.subr.bf16.mxu0 0
      %392 = vmatpush1.bf16.msra.mxu0 0
      %393 = vmatprep.subr.bf16.mxu0 0
      %394 = vmatpush1.bf16.msra.mxu0 0
      %395 = vmatprep.subr.bf16.mxu0 0
      %396 = vmatpush1.bf16.msra.mxu0 0
      %397 = vmatprep.subr.bf16.mxu0 0
      %398 = vmatpush1.bf16.msra.mxu0 0
      %399 = vmatprep.mubr.bf16.mxu0 0
      %400 = vmatmul.mubr.bf16.gmra.mrb[0].mxu0 %v315
      %v401 = vpop.f32.mrb[0].mxu0
      %v402 = vadd.f32 %v306, %v401
      %v403 = vpop.f32.mrb[0].mxu0
      %v404 = vpop.f32.mrb[0].mxu0
      %v405 = vadd.f32 %v307, %v404
      %v406 = vpop.f32.mrb[0].mxu0
      %407 = vmatprep.mubr.bf16.mxu0 0
      %408 = vmatmul.mubr.bf16.gmra.mrb[0].mxu0 %v316
      %v409 = vpop.f32.mrb[0].mxu0
      %v410 = vadd.f32 %v308, %v409
      %v411 = vpop.f32.mrb[0].mxu0
      %v412 = vpop.f32.mrb[0].mxu0
      %v413 = vpop.f32.mrb[0].mxu0
      %414 = vdwg.mxu0
      %vm415 = vcmask 261120
      %v416 = vsel %vm415, %v402, 0.0
      %417 = vadd.xlane.f32.xlu0 %v416
      %v418 = vpop.xlane.xlu0 %417
      %v419 = vsel %vm415, %v405, 0.0
      %420 = vadd.xlane.f32.xlu0 %v419
      %v421 = vpop.xlane.xlu0 %420
      %vm422 = vcmask 253952
      %v423 = vsel %vm422, %v410, 0.0
      %424 = vadd.xlane.f32.xlu0 %v423
      %v425 = vpop.xlane.xlu0 %424
      %v426 = vrcp.pop 32.0
      %v427 = vmul.f32 %v418, %v426
      %v428 = vmul.f32 %v421, %v426
      %v429 = vmul.f32 %v425, %v426
      %v430 = vsub.f32 %v402, %v427
      %v431 = vsub.f32 %v405, %v428
      %v432 = vsub.f32 %v410, %v429
      %v433 = vmul.f32 %v430, %v430
      %v434 = vmul.f32 %v431, %v431
      %v435 = vmul.f32 %v432, %v432
      %v436 = vsel %vm415, %v433, 0.0
      %437 = vadd.xlane.f32.xlu0 %v436
      %v438 = vpop.xlane.xlu0 %437
      %v439 = vsel %vm415, %v434, 0.0
      %440 = vadd.xlane.f32.xlu0 %v439
      %v441 = vpop.xlane.xlu0 %440
      %v442 = vsel %vm422, %v435, 0.0
      %443 = vadd.xlane.f32.xlu0 %v442
      %v444 = vpop.xlane.xlu0 %443
      %v445 = vmul.f32 %v438, %v426
      %v446 = vmul.f32 %v441, %v426
      %v447 = vmul.f32 %v444, %v426
      %v448 = vadd.f32 %v445, 1e-05
      %v449 = vadd.f32 %v446, 1e-05
      %v450 = vadd.f32 %v447, 1e-05
      %v451 = vrsqrt.pop %v448
      %v452 = vrsqrt.pop %v449
      %v453 = vrsqrt.pop %v450
      %v454 = vmul.f32 %v430, %v451
      %v455 = vmul.f32 %v431, %v452
      %v456 = vmul.f32 %v432, %v453
      %v457 = vld [vmem:[%s3] sm:$0x1]
      %v459 = vlaneseq
      %v460 = vshrl.u32 %v459, 7
      %v461 = vsub.s32 0, %v460
      %v462 = vrot.slane %v457, %v461
      %v464 = vmul.f32 %v454, %v462
      %v465 = vmul.f32 %v455, %v462
      %v466 = vmul.f32 %v456, %v462
      %v467 = vld [vmem:[%s4] sm:$0x1]
      %v469 = vlaneseq
      %v470 = vshrl.u32 %v469, 7
      %v471 = vsub.s32 0, %v470
      %v472 = vrot.slane %v467, %v471
      %v474 = vadd.f32 %v464, %v472
      %v475 = vadd.f32 %v465, %v472
      %v476 = vadd.f32 %v466, %v472
      %477 = vst.msk [vmem:[%s284] sm:$0xff] %vm415, %v474
      %478 = vst.msk [vmem:[%s284 + $0x8] sm:$0xff] %vm415, %v475
      %479 = vst.msk [vmem:[%s284 + $0x10] sm:$0x1] %vm422, %v476
      %s480 = smul.u32 3, %s20
      %p481 = scmp.lt.s32.totalorder %s21, 1
      %s482 = scalar_select %p481, %s21, 1
      %p483 = scmp.lt.s32.totalorder %s480, 2
      %s484 = scalar_select %p483, %s480, 2
      %s485 = smul.addr %s482, 3
      %s486 = sadd.s32 %s484, %s485
      %s487 = smul.addr %s486, 8
      %s488 = scalar_lea.vmem %s5, %s487
      // Predicated region
      $region41: #{_lambda_.1} parent=39 // pred_check
        %p489 = pneg %p165
      $region42: #{_lambda_.1} parent=39 // pred_check_branch
        %491 = sbr.rel (%p489) target = $region44
      $region43: #{_lambda_.1} parent=39 // pred_region
        %s492 = smul.u32 3, %s20
      $region44: #{_lambda_.1} parent=39 // pred_fallthru
        _
    $region40: #{_lambda_.1} parent=5 // pred_fallthru
      _
    %p493 = scmp.le.s32.totalorder 2, %s11
    // Predicated region
    $region45: #{_lambda_.1} parent=5 // pred_check
      %p494 = pneg %p493
    $region46: #{_lambda_.1} parent=5 // pred_check_branch
      %496 = sbr.rel (%p494) target = $region48
    $region47: #{_lambda_.1} parent=5 // pred_region
      %s497 = ssub.s32 %s11, 2
      // Predicated region
      $region49: #{_lambda_.1} parent=47 // pred_check
        %p498 = pneg %p171
      $region50: #{_lambda_.1} parent=47 // pred_check_branch
        %500 = sbr.rel (%p498) target = $region52
      $region51: #{_lambda_.1} parent=47 // pred_region
        %s501 = smul.u32 3, %s22
        %p502 = scmp.lt.s32.totalorder %s23, 1
        %s503 = scalar_select %p502, %s23, 1
        %p504 = scmp.lt.s32.totalorder %s501, 2
        %s505 = scalar_select %p504, %s501, 2
        %s506 = smul.addr %s503, 3
        %s507 = sadd.s32 %s505, %s506
        %s508 = smul.addr %s507, 8
        %s509 = scalar_lea.vmem %s5, %s508
      $region52: #{_lambda_.1} parent=47 // pred_fallthru
        _
    $region48: #{_lambda_.1} parent=5 // pred_fallthru
      _
  $region6: #{_lambda_.1} parent=0 // loop_footer
    %s15 = sadd.s32 1, %s11
  $region7: #{_lambda_.1} parent=0 // loop_footer_branch
    %10 = sbr.rel target = $region3
  $region8: #{_lambda_.1} parent=0 // loop_exit
    _

</llo_original>
